<compile_context>
chip_gen: v5e
topology: v5e:2x2
jax: 0.10.0
libtpu: 0.0.40
codegen_flags: <defaults>
</compile_context>

<pallas_src>
import functools

import numpy as np
import jax
import jax.numpy as jnp
from jax.experimental import pallas as pl
from jax.experimental.pallas import tpu as pltpu


LANE = 128


def _round_up(n, m=LANE):
    return ((int(n) + m - 1) // m) * m


def _pad2d(a, rows, cols):
    out = np.zeros((rows, cols), dtype=a.dtype)
    out[: a.shape[0], : a.shape[1]] = a
    return out


# ----------------------------------------------------------------------------
# Fused forward kernel: bottom MLP + embedding-bag reduce + interaction + top MLP
# ----------------------------------------------------------------------------
def _apply_act(x, act):
    if act == "relu":
        return jnp.maximum(x, 0.0)
    if act == "sigmoid":
        return jax.nn.sigmoid(x)
    return x


def _bf16_dot(x_f32, w_bf16):
    # bf16 MXU inputs, f32 accumulation (per review).
    return jnp.dot(x_f32.astype(jnp.bfloat16), w_bf16,
                   preferred_element_type=jnp.float32)


def _dlrm_fused_kernel(*refs, n_bot, n_tables, n_top_rest, acts_bot, acts_top):
    it = iter(refs)
    x_ref = next(it)
    bot = [(next(it), next(it)) for _ in range(n_bot)]
    embs = [(next(it), next(it)) for _ in range(n_tables)]      # (bag, rows)
    w1x_ref, w1z_ref, b1_ref = next(it), next(it), next(it)
    top_rest = [(next(it), next(it)) for _ in range(n_top_rest)]
    o_ref = next(it)

    # ---- bottom MLP: bf16 MXU matmuls + f32 VPU/EUP activations ----------
    x = x_ref[...]
    for (wt_ref, b_ref), act in zip(bot, acts_bot):
        x = _apply_act(_bf16_dot(x, wt_ref[...]) + b_ref[...], act)

    # ---- EmbeddingBag(mode='sum'): one lane-dense matmul per table --------
    # rows_k = table_k[idx_k] (gathered outside), bag_k = 0/1 bag membership;
    # bag @ rows == per-bag sum (duplicates counted, empty bags -> zeros).
    ly = [jnp.dot(bag_ref[...], rows_ref[...],
                  preferred_element_type=jnp.float32)
          for bag_ref, rows_ref in embs]

    # ---- 'dot' interaction, fused into the first top-MLP layer ------------
    # Pair selection (strict lower triangle, PyTorch order) was folded into
    # w1z at init:  h = x @ W1x + Z.reshape(B, F*F) @ W1z + b1.
    feats = [x] + ly
    bsz, fcnt = x.shape[0], len(feats)
    t = jnp.stack(feats, axis=1).astype(jnp.bfloat16)            # (B, F, Dp)
    z = jnp.einsum("bfd,bgd->bfg", t, t,
                   preferred_element_type=jnp.float32)           # (B, F, F)
    zflat = z.reshape(bsz, fcnt * fcnt).astype(jnp.bfloat16)     # (B, F*F)

    h = (_bf16_dot(x, w1x_ref[...])
         + jnp.dot(zflat, w1z_ref[...], preferred_element_type=jnp.float32)
         + b1_ref[...])
    h = _apply_act(h, acts_top[0])

    # ---- remaining top-MLP layers ------------------------------------------
    for (wt_ref, b_ref), act in zip(top_rest, acts_top[1:]):
        h = _apply_act(_bf16_dot(h, wt_ref[...]) + b_ref[...], act)

    o_ref[...] = h.astype(o_ref.dtype)                           # lane-dense (B, 128)


def _dlrm_forward(params, dense_x, lS_o, lS_i, *, acts_bot, acts_top,
                  loss_threshold, dense_in_dim, out_dim):
    bot = params["bot"]
    tables = params["emb"]
    top_rest = params["top_rest"]
    B = dense_x.shape[0]

    # Pad the dense features to the lane-dense bottom-MLP input width.
    in_pad = bot[0][0].shape[0]
    x = jnp.zeros((B, in_pad), jnp.float32).at[:, :dense_in_dim].set(
        dense_x.astype(jnp.float32))

    inputs = [x]
    for wt, b in bot:
        inputs += [wt, b]

    # Embedding-bag prep (cheap XLA ops outside the kernel): row gather +
    # bag-membership matrix built from offsets.  Padded bag columns are zero,
    # so the zero-padded gathered rows never contribute.
    for k, tbl in enumerate(tables):
        idx = lS_i[k].astype(jnp.int32)
        off = lS_o[k].astype(jnp.int32)
        n = idx.shape[0]
        n_pad = _round_up(max(n, 1))
        idx_pad = jnp.pad(idx, (0, n_pad - n))
        rows = jnp.take(tbl, idx_pad, axis=0)                    # (Np, Dp) bf16
        ends = jnp.concatenate([off[1:], jnp.full((1,), n, jnp.int32)])
        pos = jnp.arange(n_pad, dtype=jnp.int32)[None, :]
        bag = jnp.logical_and(pos >= off[:, None],
                              pos < ends[:, None]).astype(jnp.bfloat16)
        inputs += [bag, rows]

    inputs += [params["w1x"], params["w1z"], params["b1"]]
    for wt, b in top_rest:
        inputs += [wt, b]

    out_pad = top_rest[-1][0].shape[1] if top_rest else params["w1x"].shape[1]
    kern = functools.partial(
        _dlrm_fused_kernel,
        n_bot=len(bot), n_tables=len(tables), n_top_rest=len(top_rest),
        acts_bot=acts_bot, acts_top=acts_top)

    vmem = pl.BlockSpec(memory_space=pltpu.MemorySpace.VMEM)
    # Single program: every operand is one lane-dense VMEM block (small shapes).
    # TODO(synk): for production DLRM sizes, add a batch grid axis with
    # dimension_semantics=("parallel",) (2 TensorCores on v7x), keep embedding
    # tables in HBM (memory_space=pl.ANY) with scalar-prefetched offsets and
    # double-buffered row DMA (pltpu.make_async_copy + SemaphoreType.DMA), and
    # set pltpu.CompilerParams(vmem_limit_bytes=...) for v5e's 16 MiB scoped
    # default; pad the larger MLP widths to 256 on v6e/v7x.
    p_pad = pl.pallas_call(
        kern,
        out_shape=jax.ShapeDtypeStruct((B, out_pad), jnp.float32),
        in_specs=[vmem] * len(inputs),
        out_specs=vmem,
    )(*inputs)

    p = p_pad[:, :out_dim]
    if 0.0 < loss_threshold < 1.0:
        p = jnp.clip(p, loss_threshold, 1.0 - loss_threshold)
    return p


# ----------------------------------------------------------------------------
# DLRM_Net (sequential_forward path) built on the fused Pallas kernel.
# ----------------------------------------------------------------------------
class DLRMNetPallas:
    def __init__(self, m_spa, ln_emb, ln_bot, ln_top,
                 arch_interaction_op="dot", arch_interaction_itself=False,
                 sigmoid_bot=-1, sigmoid_top=-1, loss_threshold=0.0, seed=0):
        assert arch_interaction_op == "dot"
        assert not arch_interaction_itself
        assert int(ln_bot[-1]) == int(m_spa)
        # TODO(synk): QR/MD embedding variants, multi-device parallel_forward
        # (replicate/scatter/gather) and the train/test harness are host-side
        # and out of scope for this kernel port.
        self.loss_threshold = float(loss_threshold)
        rng = np.random.RandomState(seed)   # deterministic synthetic weights

        # Raw f32 parameters (reference semantics identical to the PyTorch init).
        self.bot_raw, self.acts_bot = self._make_mlp(rng, ln_bot, sigmoid_bot)
        self.top_raw, self.acts_top = self._make_mlp(rng, ln_top, sigmoid_top)
        self.emb_raw = []
        for n in ln_emb:
            W = rng.uniform(low=-np.sqrt(1.0 / n), high=np.sqrt(1.0 / n),
                            size=(n, m_spa)).astype(np.float32)
            self.emb_raw.append(W)

        # ---- kernel parameters: zero-pad to 128 lanes + pre-cast to bf16 ----
        d_pad = _round_up(m_spa)
        F = 1 + len(ln_emb)
        num_pairs = F * (F - 1) // 2
        assert int(ln_top[0]) == int(m_spa) + num_pairs

        def pad_mlp(layers):
            out = []
            for wt, b in layers:                      # wt: (in, out), b: (out,)
                ip, op = _round_up(wt.shape[0]), _round_up(wt.shape[1])
                out.append((jnp.asarray(_pad2d(wt, ip, op), dtype=jnp.bfloat16),
                            jnp.asarray(_pad2d(b[None, :], 1, op),
                                        dtype=jnp.float32)))
            return out

        bot_pad = pad_mlp(self.bot_raw)

        # Fold the strictly-lower-triangular pair selection into top layer 0:
        #   top0(x, Z) = x @ W1x + Z.reshape(B, F*F) @ (S @ W1pairs) + b1
        w1t, b1 = self.top_raw[0]                      # (m_spa + P, m1), (m1,)
        m1 = w1t.shape[1]
        w1x = w1t[:m_spa, :]
        w1p = w1t[m_spa:, :]
        sel = np.zeros((F * F, num_pairs), np.float32)
        p = 0
        for i in range(F):                             # PyTorch pair order
            for j in range(i):
                sel[i * F + j, p] = 1.0
                p += 1
        w1z = sel @ w1p                                # (F*F, m1)
        m1_pad = _round_up(m1)
        w1x_pad = jnp.asarray(_pad2d(w1x, d_pad, m1_pad), dtype=jnp.bfloat16)
        w1z_pad = jnp.asarray(_pad2d(w1z, F * F, m1_pad), dtype=jnp.bfloat16)
        b1_pad = jnp.asarray(_pad2d(b1[None, :], 1, m1_pad), dtype=jnp.float32)

        top_rest_pad = pad_mlp(self.top_raw[1:])

        emb_pad = [jnp.asarray(_pad2d(W, W.shape[0], d_pad), dtype=jnp.bfloat16)
                   for W in self.emb_raw]

        self._params = {"bot": bot_pad, "emb": emb_pad, "w1x": w1x_pad,
                        "w1z": w1z_pad, "b1": b1_pad, "top_rest": top_rest_pad}
        self._fwd = jax.jit(functools.partial(
            _dlrm_forward, acts_bot=self.acts_bot, acts_top=self.acts_top,
            loss_threshold=self.loss_threshold,
            dense_in_dim=int(ln_bot[0]), out_dim=int(ln_top[-1])))

    @staticmethod
    def _make_mlp(rng, ln, sigmoid_layer):
        layers, acts = [], []
        for i in range(len(ln) - 1):
            n, m = int(ln[i]), int(ln[i + 1])
            W = rng.normal(0.0, np.sqrt(2.0 / (m + n)),
                           size=(m, n)).astype(np.float32)
            b = rng.normal(0.0, np.sqrt(1.0 / m), size=(m,)).astype(np.float32)
            layers.append((np.ascontiguousarray(W.T), b))   # store (in, out)
            acts.append("sigmoid" if i == sigmoid_layer else "relu")
        return layers, tuple(acts)

    def forward(self, dense_x, lS_o, lS_i):
        return self._fwd(self._params, dense_x, tuple(lS_o), tuple(lS_i))


# ----------------------------------------------------------------------------
# Pure-numpy f32 reference (mirrors the PyTorch semantics) for verification.
# ----------------------------------------------------------------------------
def reference_forward(model, dense_x, lS_o, lS_i):
    def run_mlp(v, layers, acts):
        for (wt, b), act in zip(layers, acts):
            v = v @ wt + b
            v = 1.0 / (1.0 + np.exp(-v)) if act == "sigmoid" else np.maximum(v, 0.0)
        return v

    x = run_mlp(np.asarray(dense_x, np.float32), model.bot_raw, model.acts_bot)
    ly = []
    for k, tbl in enumerate(model.emb_raw):
        off = np.asarray(lS_o[k]); idx = np.asarray(lS_i[k])
        B = off.shape[0]
        rows = []
        for b in range(B):
            s = int(off[b])
            e = int(off[b + 1]) if (b + 1) < B else idx.shape[0]
            seg = tbl[idx[s:e]]
            rows.append(seg.sum(axis=0) if seg.shape[0] > 0
                        else np.zeros((tbl.shape[1],), np.float32))
        ly.append(np.stack(rows).astype(np.float32))
    B, d = x.shape
    T = np.concatenate([x] + ly, axis=1).reshape(B, -1, d)
    Z = np.einsum("bid,bjd->bij", T, T)
    F = T.shape[1]
    li = [i for i in range(F) for j in range(i)]
    lj = [j for i in range(F) for j in range(i)]
    Zflat = Z[:, li, lj]
    p = np.concatenate([x, Zflat], axis=1)
    p = run_mlp(p, model.top_raw, model.acts_top)
    if 0.0 < model.loss_threshold < 1.0:
        p = np.clip(p, model.loss_threshold, 1.0 - model.loss_threshold)
    return p


if __name__ == "__main__":
    B = 8          # batch
    L = 4          # indices per bag (uniform offsets, like the torch driver)
    m_spa = 16     # embedding dim
    ln_emb = [40, 50, 60]            # 3 embedding tables
    ln_bot = [13, 64, 16]            # bottom MLP: 13 dense feats -> 16
    F = 1 + len(ln_emb)
    num_pairs = F * (F - 1) // 2     # 6 pairwise dot-interaction features
    ln_top = [m_spa + num_pairs, 32, 1]

    model = DLRMNetPallas(m_spa, ln_emb, ln_bot, ln_top,
                          arch_interaction_op="dot",
                          sigmoid_bot=-1, sigmoid_top=len(ln_top) - 2,
                          loss_threshold=0.0, seed=0)

    key = jax.random.PRNGKey(0)
    keys = jax.random.split(key, 1 + len(ln_emb))
    dense_x = jax.random.normal(keys[0], (B, ln_bot[0]), dtype=jnp.float32)
    lS_o = [jnp.arange(B, dtype=jnp.int32) * L for _ in ln_emb]
    lS_i = [jax.random.randint(keys[1 + t], (B * L,), 0, ln_emb[t],
                               dtype=jnp.int32)
            for t in range(len(ln_emb))]

    out = model.forward(dense_x, lS_o, lS_i)
    out = jax.block_until_ready(out)

    ref = reference_forward(model, dense_x, lS_o, lS_i)
    # bf16 matmul inputs with f32 accumulation -> relaxed tolerance.
    np.testing.assert_allclose(np.asarray(out), np.asarray(ref),
                               rtol=2e-2, atol=2e-2)
    assert out.shape == (B, 1)
    print("KERNEL_OK")
</pallas_src>

<mosaic_0001>
module attributes {stable_mosaic.version = 11 : i64} {
  func.func @_dlrm_fused_kernel(%arg0: memref<8x128xf32, #tpu.memory_space<vmem>>, %arg1: memref<128x128xbf16, #tpu.memory_space<vmem>>, %arg2: memref<1x128xf32, #tpu.memory_space<vmem>>, %arg3: memref<128x128xbf16, #tpu.memory_space<vmem>>, %arg4: memref<1x128xf32, #tpu.memory_space<vmem>>, %arg5: memref<8x128xbf16, #tpu.memory_space<vmem>>, %arg6: memref<128x128xbf16, #tpu.memory_space<vmem>>, %arg7: memref<8x128xbf16, #tpu.memory_space<vmem>>, %arg8: memref<128x128xbf16, #tpu.memory_space<vmem>>, %arg9: memref<8x128xbf16, #tpu.memory_space<vmem>>, %arg10: memref<128x128xbf16, #tpu.memory_space<vmem>>, %arg11: memref<128x128xbf16, #tpu.memory_space<vmem>>, %arg12: memref<16x128xbf16, #tpu.memory_space<vmem>>, %arg13: memref<1x128xf32, #tpu.memory_space<vmem>>, %arg14: memref<128x128xbf16, #tpu.memory_space<vmem>>, %arg15: memref<1x128xf32, #tpu.memory_space<vmem>>, %arg16: memref<8x128xf32, #tpu.memory_space<vmem>>) attributes {dimension_semantics = [], scalar_prefetch = 0 : i64, scratch_operands = 0 : i64, tpu.core_type = #tpu.core_type<tc>} {
    %c0 = arith.constant 0 : index
    %c0_0 = arith.constant 0 : index
    %0 = vector.load %arg0[%c0, %c0_0] : memref<8x128xf32, #tpu.memory_space<vmem>>, vector<8x128xf32>
    %c0_1 = arith.constant 0 : index
    %c0_2 = arith.constant 0 : index
    %1 = vector.load %arg1[%c0_1, %c0_2] : memref<128x128xbf16, #tpu.memory_space<vmem>>, vector<128x128xbf16>
    %2 = arith.truncf %0 : vector<8x128xf32> to vector<8x128xbf16>
    %cst = arith.constant dense<0.000000e+00> : vector<8x128xf32>
    %3 = tpu.matmul %2, %1, %cst {dimension_numbers = #tpu.dot_dimension_numbers<[1], [0], [0], [1], [0, 0, 1, 1], [], []>} : vector<8x128xbf16>, vector<128x128xbf16>, vector<8x128xf32> -> vector<8x128xf32>
    %c0_3 = arith.constant 0 : index
    %c0_4 = arith.constant 0 : index
    %4 = vector.load %arg2[%c0_3, %c0_4] : memref<1x128xf32, #tpu.memory_space<vmem>>, vector<1x128xf32>
    %5 = vector.broadcast %4 : vector<1x128xf32> to vector<8x128xf32>
    %6 = arith.addf %3, %5 : vector<8x128xf32>
    %cst_5 = arith.constant 0.000000e+00 : f32
    %7 = vector.broadcast %cst_5 : f32 to vector<8x128xf32>
    %8 = arith.maximumf %6, %7 : vector<8x128xf32>
    %c0_6 = arith.constant 0 : index
    %c0_7 = arith.constant 0 : index
    %9 = vector.load %arg3[%c0_6, %c0_7] : memref<128x128xbf16, #tpu.memory_space<vmem>>, vector<128x128xbf16>
    %10 = arith.truncf %8 : vector<8x128xf32> to vector<8x128xbf16>
    %cst_8 = arith.constant dense<0.000000e+00> : vector<8x128xf32>
    %11 = tpu.matmul %10, %9, %cst_8 {dimension_numbers = #tpu.dot_dimension_numbers<[1], [0], [0], [1], [0, 0, 1, 1], [], []>} : vector<8x128xbf16>, vector<128x128xbf16>, vector<8x128xf32> -> vector<8x128xf32>
    %c0_9 = arith.constant 0 : index
    %c0_10 = arith.constant 0 : index
    %12 = vector.load %arg4[%c0_9, %c0_10] : memref<1x128xf32, #tpu.memory_space<vmem>>, vector<1x128xf32>
    %13 = vector.broadcast %12 : vector<1x128xf32> to vector<8x128xf32>
    %14 = arith.addf %11, %13 : vector<8x128xf32>
    %cst_11 = arith.constant 0.000000e+00 : f32
    %15 = vector.broadcast %cst_11 : f32 to vector<8x128xf32>
    %16 = arith.maximumf %14, %15 : vector<8x128xf32>
    %c0_12 = arith.constant 0 : index
    %c0_13 = arith.constant 0 : index
    %17 = vector.load %arg5[%c0_12, %c0_13] : memref<8x128xbf16, #tpu.memory_space<vmem>>, vector<8x128xbf16>
    %c0_14 = arith.constant 0 : index
    %c0_15 = arith.constant 0 : index
    %18 = vector.load %arg6[%c0_14, %c0_15] : memref<128x128xbf16, #tpu.memory_space<vmem>>, vector<128x128xbf16>
    %cst_16 = arith.constant dense<0.000000e+00> : vector<8x128xf32>
    %19 = tpu.matmul %17, %18, %cst_16 {dimension_numbers = #tpu.dot_dimension_numbers<[1], [0], [0], [1], [0, 0, 1, 1], [], []>} : vector<8x128xbf16>, vector<128x128xbf16>, vector<8x128xf32> -> vector<8x128xf32>
    %c0_17 = arith.constant 0 : index
    %c0_18 = arith.constant 0 : index
    %20 = vector.load %arg7[%c0_17, %c0_18] : memref<8x128xbf16, #tpu.memory_space<vmem>>, vector<8x128xbf16>
    %c0_19 = arith.constant 0 : index
    %c0_20 = arith.constant 0 : index
    %21 = vector.load %arg8[%c0_19, %c0_20] : memref<128x128xbf16, #tpu.memory_space<vmem>>, vector<128x128xbf16>
    %cst_21 = arith.constant dense<0.000000e+00> : vector<8x128xf32>
    %22 = tpu.matmul %20, %21, %cst_21 {dimension_numbers = #tpu.dot_dimension_numbers<[1], [0], [0], [1], [0, 0, 1, 1], [], []>} : vector<8x128xbf16>, vector<128x128xbf16>, vector<8x128xf32> -> vector<8x128xf32>
    %c0_22 = arith.constant 0 : index
    %c0_23 = arith.constant 0 : index
    %23 = vector.load %arg9[%c0_22, %c0_23] : memref<8x128xbf16, #tpu.memory_space<vmem>>, vector<8x128xbf16>
    %c0_24 = arith.constant 0 : index
    %c0_25 = arith.constant 0 : index
    %24 = vector.load %arg10[%c0_24, %c0_25] : memref<128x128xbf16, #tpu.memory_space<vmem>>, vector<128x128xbf16>
    %cst_26 = arith.constant dense<0.000000e+00> : vector<8x128xf32>
    %25 = tpu.matmul %23, %24, %cst_26 {dimension_numbers = #tpu.dot_dimension_numbers<[1], [0], [0], [1], [0, 0, 1, 1], [], []>} : vector<8x128xbf16>, vector<128x128xbf16>, vector<8x128xf32> -> vector<8x128xf32>
    %26 = vector.shape_cast %16 : vector<8x128xf32> to vector<8x1x128xf32>
    %27 = vector.shape_cast %19 : vector<8x128xf32> to vector<8x1x128xf32>
    %28 = vector.shape_cast %22 : vector<8x128xf32> to vector<8x1x128xf32>
    %29 = vector.shape_cast %25 : vector<8x128xf32> to vector<8x1x128xf32>
    %30 = tpu.concatenate %26, %27, %28, %29 in 1 : vector<8x1x128xf32>, vector<8x1x128xf32>, vector<8x1x128xf32>, vector<8x1x128xf32> -> vector<8x4x128xf32>
    %31 = arith.truncf %30 : vector<8x4x128xf32> to vector<8x4x128xbf16>
    "tpu.trace_start"() <{level = 10 : i32, message = "bfd,bgd->bfg"}> : () -> ()
    %cst_27 = arith.constant dense<0.000000e+00> : vector<8x4x4xf32>
    %32 = tpu.matmul %31, %31, %cst_27 {dimension_numbers = #tpu.dot_dimension_numbers<[2], [2], [1], [1], [0, 0, 0, 1, 1, 1], [0], [0]>} : vector<8x4x128xbf16>, vector<8x4x128xbf16>, vector<8x4x4xf32> -> vector<8x4x4xf32>
    "tpu.trace_stop"() : () -> ()
    %33 = vector.shape_cast %32 : vector<8x4x4xf32> to vector<8x16xf32>
    %34 = arith.truncf %33 : vector<8x16xf32> to vector<8x16xbf16>
    %c0_28 = arith.constant 0 : index
    %c0_29 = arith.constant 0 : index
    %35 = vector.load %arg11[%c0_28, %c0_29] : memref<128x128xbf16, #tpu.memory_space<vmem>>, vector<128x128xbf16>
    %36 = arith.truncf %16 : vector<8x128xf32> to vector<8x128xbf16>
    %cst_30 = arith.constant dense<0.000000e+00> : vector<8x128xf32>
    %37 = tpu.matmul %36, %35, %cst_30 {dimension_numbers = #tpu.dot_dimension_numbers<[1], [0], [0], [1], [0, 0, 1, 1], [], []>} : vector<8x128xbf16>, vector<128x128xbf16>, vector<8x128xf32> -> vector<8x128xf32>
    %c0_31 = arith.constant 0 : index
    %c0_32 = arith.constant 0 : index
    %38 = vector.load %arg12[%c0_31, %c0_32] : memref<16x128xbf16, #tpu.memory_space<vmem>>, vector<16x128xbf16>
    %cst_33 = arith.constant dense<0.000000e+00> : vector<8x128xf32>
    %39 = tpu.matmul %34, %38, %cst_33 {dimension_numbers = #tpu.dot_dimension_numbers<[1], [0], [0], [1], [0, 0, 1, 1], [], []>} : vector<8x16xbf16>, vector<16x128xbf16>, vector<8x128xf32> -> vector<8x128xf32>
    %40 = arith.addf %37, %39 : vector<8x128xf32>
    %c0_34 = arith.constant 0 : index
    %c0_35 = arith.constant 0 : index
    %41 = vector.load %arg13[%c0_34, %c0_35] : memref<1x128xf32, #tpu.memory_space<vmem>>, vector<1x128xf32>
    %42 = vector.broadcast %41 : vector<1x128xf32> to vector<8x128xf32>
    %43 = arith.addf %40, %42 : vector<8x128xf32>
    %cst_36 = arith.constant 0.000000e+00 : f32
    %44 = vector.broadcast %cst_36 : f32 to vector<8x128xf32>
    %45 = arith.maximumf %43, %44 : vector<8x128xf32>
    %c0_37 = arith.constant 0 : index
    %c0_38 = arith.constant 0 : index
    %46 = vector.load %arg14[%c0_37, %c0_38] : memref<128x128xbf16, #tpu.memory_space<vmem>>, vector<128x128xbf16>
    %47 = arith.truncf %45 : vector<8x128xf32> to vector<8x128xbf16>
    %cst_39 = arith.constant dense<0.000000e+00> : vector<8x128xf32>
    %48 = tpu.matmul %47, %46, %cst_39 {dimension_numbers = #tpu.dot_dimension_numbers<[1], [0], [0], [1], [0, 0, 1, 1], [], []>} : vector<8x128xbf16>, vector<128x128xbf16>, vector<8x128xf32> -> vector<8x128xf32>
    %c0_40 = arith.constant 0 : index
    %c0_41 = arith.constant 0 : index
    %49 = vector.load %arg15[%c0_40, %c0_41] : memref<1x128xf32, #tpu.memory_space<vmem>>, vector<1x128xf32>
    %50 = vector.broadcast %49 : vector<1x128xf32> to vector<8x128xf32>
    %51 = arith.addf %48, %50 : vector<8x128xf32>
    %52 = arith.negf %51 : vector<8x128xf32>
    %53 = math.exp %52 : vector<8x128xf32>
    %cst_42 = arith.constant 1.000000e+00 : f32
    %54 = vector.broadcast %cst_42 : f32 to vector<8x128xf32>
    %55 = arith.addf %54, %53 : vector<8x128xf32>
    %56 = arith.divf %54, %55 : vector<8x128xf32>
    %c0_43 = arith.constant 0 : index
    %c0_44 = arith.constant 0 : index
    %57 = vector.load %arg16[%c0_43, %c0_44] : memref<8x128xf32, #tpu.memory_space<vmem>>, vector<8x128xf32>
    tpu.vector_store %arg16[%c0_43, %c0_44], %56 {strides = array<i32>} : memref<8x128xf32, #tpu.memory_space<vmem>>, vector<8x128xf32>,
    return
  }
}

</mosaic_0001>

<llo_original>
// kernel: _dlrm_forward.1
$region0: #{_dlrm_forward.1}
  #allocation0 [shape = 'u32[]', space=smem, size = 0x4, offset = 0x4, fixed_abs, tag = 'smem constant byte address 0x4 - core index']
  #allocation1 [shape = 'u32[72,128]{1,0:T(1,128)}', space=vmem, size = 0x9000, scoped, tag = 'internal scratch']
  %s0 = inlined_call_operand.vmem [shape: f32[8,128], index: 0, kind: input, shape index: {}]
  %s1 = inlined_call_operand.vmem [shape: bf16[128,128], index: 1, kind: input, shape index: {}]
  %s2 = inlined_call_operand.vmem [shape: f32[1,128], index: 2, kind: input, shape index: {}]
  %s3 = inlined_call_operand.vmem [shape: bf16[128,128], index: 3, kind: input, shape index: {}]
  %s4 = inlined_call_operand.vmem [shape: f32[1,128], index: 4, kind: input, shape index: {}]
  %s5 = inlined_call_operand.vmem [shape: bf16[8,128], index: 5, kind: input, shape index: {}]
  %s6 = inlined_call_operand.vmem [shape: bf16[128,128], index: 6, kind: input, shape index: {}]
  %s7 = inlined_call_operand.vmem [shape: bf16[8,128], index: 7, kind: input, shape index: {}]
  %s8 = inlined_call_operand.vmem [shape: bf16[128,128], index: 8, kind: input, shape index: {}]
  %s9 = inlined_call_operand.vmem [shape: bf16[8,128], index: 9, kind: input, shape index: {}]
  %s10 = inlined_call_operand.vmem [shape: bf16[128,128], index: 10, kind: input, shape index: {}]
  %s11 = inlined_call_operand.vmem [shape: bf16[128,128], index: 11, kind: input, shape index: {}]
  %s12 = inlined_call_operand.vmem [shape: bf16[16,128], index: 12, kind: input, shape index: {}]
  %s13 = inlined_call_operand.vmem [shape: f32[1,128], index: 13, kind: input, shape index: {}]
  %s14 = inlined_call_operand.vmem [shape: bf16[128,128], index: 14, kind: input, shape index: {}]
  %s15 = inlined_call_operand.vmem [shape: f32[1,128], index: 15, kind: input, shape index: {}]
  %s16 = inlined_call_operand.vmem [shape: f32[8,128], index: 16, kind: output, shape index: {}]
  %s17 = sld [smem:[#allocation0]]
  $region74: #{_dlrm_forward.1} parent=0
    _
  %s19 = ssub.s32 1, %s17
  %s20 = scalar_select 0, %s19, %s17
  // Predicated region
  $region2: #{_dlrm_forward.1} parent=0 // pred_check
    _
  $region3: #{_dlrm_forward.1} parent=0 // pred_check_branch
    %22 = sbr.rel (0) target = $region5
  $region4: #{_dlrm_forward.1} parent=0 // pred_region
    _
  $region5: #{_dlrm_forward.1} parent=0 // pred_fallthru
    _
  // Predicated region
  $region6: #{_dlrm_forward.1} parent=0 // pred_check
    _
  $region7: #{_dlrm_forward.1} parent=0 // pred_check_branch
    %24 = sbr.rel (0) target = $region9
  $region8: #{_dlrm_forward.1} parent=0 // pred_region
    _
  $region9: #{_dlrm_forward.1} parent=0 // pred_fallthru
    _
  // Predicated region
  $region10: #{_dlrm_forward.1} parent=0 // pred_check
    _
  $region11: #{_dlrm_forward.1} parent=0 // pred_check_branch
    %26 = sbr.rel (0) target = $region13
  $region12: #{_dlrm_forward.1} parent=0 // pred_region
    _
  $region13: #{_dlrm_forward.1} parent=0 // pred_fallthru
    _
  // Predicated region
  $region14: #{_dlrm_forward.1} parent=0 // pred_check
    _
  $region15: #{_dlrm_forward.1} parent=0 // pred_check_branch
    %28 = sbr.rel (0) target = $region17
  $region16: #{_dlrm_forward.1} parent=0 // pred_region
    _
  $region17: #{_dlrm_forward.1} parent=0 // pred_fallthru
    _
  // Predicated region
  $region18: #{_dlrm_forward.1} parent=0 // pred_check
    _
  $region19: #{_dlrm_forward.1} parent=0 // pred_check_branch
    %30 = sbr.rel (0) target = $region21
  $region20: #{_dlrm_forward.1} parent=0 // pred_region
    _
  $region21: #{_dlrm_forward.1} parent=0 // pred_fallthru
    _
  // Predicated region
  $region22: #{_dlrm_forward.1} parent=0 // pred_check
    _
  $region23: #{_dlrm_forward.1} parent=0 // pred_check_branch
    %32 = sbr.rel (0) target = $region25
  $region24: #{_dlrm_forward.1} parent=0 // pred_region
    _
  $region25: #{_dlrm_forward.1} parent=0 // pred_fallthru
    _
  // Predicated region
  $region26: #{_dlrm_forward.1} parent=0 // pred_check
    _
  $region27: #{_dlrm_forward.1} parent=0 // pred_check_branch
    %34 = sbr.rel (0) target = $region29
  $region28: #{_dlrm_forward.1} parent=0 // pred_region
    _
  $region29: #{_dlrm_forward.1} parent=0 // pred_fallthru
    _
  // Predicated region
  $region30: #{_dlrm_forward.1} parent=0 // pred_check
    _
  $region31: #{_dlrm_forward.1} parent=0 // pred_check_branch
    %36 = sbr.rel (0) target = $region33
  $region32: #{_dlrm_forward.1} parent=0 // pred_region
    _
  $region33: #{_dlrm_forward.1} parent=0 // pred_fallthru
    _
  // Predicated region
  $region34: #{_dlrm_forward.1} parent=0 // pred_check
    _
  $region35: #{_dlrm_forward.1} parent=0 // pred_check_branch
    %38 = sbr.rel (0) target = $region37
  $region36: #{_dlrm_forward.1} parent=0 // pred_region
    _
  $region37: #{_dlrm_forward.1} parent=0 // pred_fallthru
    _
  // Predicated region
  $region38: #{_dlrm_forward.1} parent=0 // pred_check
    _
  $region39: #{_dlrm_forward.1} parent=0 // pred_check_branch
    %40 = sbr.rel (0) target = $region41
  $region40: #{_dlrm_forward.1} parent=0 // pred_region
    _
  $region41: #{_dlrm_forward.1} parent=0 // pred_fallthru
    _
  // Predicated region
  $region42: #{_dlrm_forward.1} parent=0 // pred_check
    _
  $region43: #{_dlrm_forward.1} parent=0 // pred_check_branch
    %42 = sbr.rel (0) target = $region45
  $region44: #{_dlrm_forward.1} parent=0 // pred_region
    _
  $region45: #{_dlrm_forward.1} parent=0 // pred_fallthru
    _
  // Predicated region
  $region46: #{_dlrm_forward.1} parent=0 // pred_check
    _
  $region47: #{_dlrm_forward.1} parent=0 // pred_check_branch
    %44 = sbr.rel (0) target = $region49
  $region48: #{_dlrm_forward.1} parent=0 // pred_region
    _
  $region49: #{_dlrm_forward.1} parent=0 // pred_fallthru
    _
  // Predicated region
  $region50: #{_dlrm_forward.1} parent=0 // pred_check
    _
  $region51: #{_dlrm_forward.1} parent=0 // pred_check_branch
    %46 = sbr.rel (0) target = $region53
  $region52: #{_dlrm_forward.1} parent=0 // pred_region
    _
  $region53: #{_dlrm_forward.1} parent=0 // pred_fallthru
    _
  // Predicated region
  $region54: #{_dlrm_forward.1} parent=0 // pred_check
    _
  $region55: #{_dlrm_forward.1} parent=0 // pred_check_branch
    %48 = sbr.rel (0) target = $region57
  $region56: #{_dlrm_forward.1} parent=0 // pred_region
    _
  $region57: #{_dlrm_forward.1} parent=0 // pred_fallthru
    _
  // Predicated region
  $region58: #{_dlrm_forward.1} parent=0 // pred_check
    _
  $region59: #{_dlrm_forward.1} parent=0 // pred_check_branch
    %50 = sbr.rel (0) target = $region61
  $region60: #{_dlrm_forward.1} parent=0 // pred_region
    _
  $region61: #{_dlrm_forward.1} parent=0 // pred_fallthru
    _
  // Predicated region
  $region62: #{_dlrm_forward.1} parent=0 // pred_check
    _
  $region63: #{_dlrm_forward.1} parent=0 // pred_check_branch
    %52 = sbr.rel (0) target = $region65
  $region64: #{_dlrm_forward.1} parent=0 // pred_region
    _
  $region65: #{_dlrm_forward.1} parent=0 // pred_fallthru
    _
  %v54 = vld [vmem:[%s0] sm:$0xff]
  %v55 = vld [vmem:[%s1] sm:$0xf]
  %v56 = vld [vmem:[%s1 + $0x4] sm:$0xf]
  %v57 = vld [vmem:[%s1 + $0x8] sm:$0xf]
  %v58 = vld [vmem:[%s1 + $0xc] sm:$0xf]
  %v59 = vld [vmem:[%s1 + $0x10] sm:$0xf]
  %v60 = vld [vmem:[%s1 + $0x14] sm:$0xf]
  %v61 = vld [vmem:[%s1 + $0x18] sm:$0xf]
  %v62 = vld [vmem:[%s1 + $0x1c] sm:$0xf]
  %v63 = vld [vmem:[%s1 + $0x20] sm:$0xf]
  %v64 = vld [vmem:[%s1 + $0x24] sm:$0xf]
  %v65 = vld [vmem:[%s1 + $0x28] sm:$0xf]
  %v66 = vld [vmem:[%s1 + $0x2c] sm:$0xf]
  %v67 = vld [vmem:[%s1 + $0x30] sm:$0xf]
  %v68 = vld [vmem:[%s1 + $0x34] sm:$0xf]
  %v69 = vld [vmem:[%s1 + $0x38] sm:$0xf]
  %v70 = vld [vmem:[%s1 + $0x3c] sm:$0xf]
  %v71 = vpack.c.bf16 %v54, %v54
  %v72 = vld [vmem:[%s2] sm:$0x1]
  %v74 = vperm.slane %v72, 0
  %v92 = vunpack.c.l.b16 %v55
  %v93 = vunpack.c.l.b16 %v56
  %v94 = vunpack.c.l.b16 %v57
  %v95 = vunpack.c.l.b16 %v58
  %v96 = vunpack.c.l.b16 %v59
  %v97 = vunpack.c.l.b16 %v60
  %v98 = vunpack.c.l.b16 %v61
  %v99 = vunpack.c.l.b16 %v62
  %v100 = vunpack.c.l.b16 %v63
  %v101 = vunpack.c.l.b16 %v64
  %v102 = vunpack.c.l.b16 %v65
  %v103 = vunpack.c.l.b16 %v66
  %v104 = vunpack.c.l.b16 %v67
  %v105 = vunpack.c.l.b16 %v68
  %v106 = vunpack.c.l.b16 %v69
  %v107 = vunpack.c.l.b16 %v70
  %v108 = vpack.c.b16 %v93, %v92
  %v109 = vpack.c.b16 %v95, %v94
  %v110 = vpack.c.b16 %v97, %v96
  %v111 = vpack.c.b16 %v99, %v98
  %v112 = vpack.c.b16 %v101, %v100
  %v113 = vpack.c.b16 %v103, %v102
  %v114 = vpack.c.b16 %v105, %v104
  %v115 = vpack.c.b16 %v107, %v106
  %124 = vmatpush.bf16.msra.mxu0 %v115
  %125 = vmatpush.bf16.msra.mxu0 %v114
  %126 = vmatpush.bf16.msra.mxu0 %v113
  %127 = vmatpush.bf16.msra.mxu0 %v112
  %128 = vmatpush.bf16.msra.mxu0 %v111
  %129 = vmatpush.bf16.msra.mxu0 %v110
  %130 = vmatpush.bf16.msra.mxu0 %v109
  %131 = vmatpush.bf16.msra.mxu0 %v108
  %132 = vmatmul.bf16.gmra.mxu0 %v71
  %v133 = vpop.f32.mrf.mxu0
  %v134 = vadd.f32 %v74, %v133
  %v135 = vpop.f32.mrf.mxu0
  %136 = vdwg.mxu0
  %v137 = vmax.f32 %v134, 0.0
  %v138 = vld [vmem:[%s3] sm:$0xf]
  %v139 = vld [vmem:[%s3 + $0x4] sm:$0xf]
  %v140 = vld [vmem:[%s3 + $0x8] sm:$0xf]
  %v141 = vld [vmem:[%s3 + $0xc] sm:$0xf]
  %v142 = vld [vmem:[%s3 + $0x10] sm:$0xf]
  %v143 = vld [vmem:[%s3 + $0x14] sm:$0xf]
  %v144 = vld [vmem:[%s3 + $0x18] sm:$0xf]
  %v145 = vld [vmem:[%s3 + $0x1c] sm:$0xf]
  %v146 = vld [vmem:[%s3 + $0x20] sm:$0xf]
  %v147 = vld [vmem:[%s3 + $0x24] sm:$0xf]
  %v148 = vld [vmem:[%s3 + $0x28] sm:$0xf]
  %v149 = vld [vmem:[%s3 + $0x2c] sm:$0xf]
  %v150 = vld [vmem:[%s3 + $0x30] sm:$0xf]
  %v151 = vld [vmem:[%s3 + $0x34] sm:$0xf]
  %v152 = vld [vmem:[%s3 + $0x38] sm:$0xf]
  %v153 = vld [vmem:[%s3 + $0x3c] sm:$0xf]
  %v154 = vpack.c.bf16 %v137, %v137
  %v155 = vld [vmem:[%s4] sm:$0x1]
  %v157 = vperm.slane %v155, 0
  %v175 = vunpack.c.l.b16 %v138
  %v176 = vunpack.c.l.b16 %v139
  %v177 = vunpack.c.l.b16 %v140
  %v178 = vunpack.c.l.b16 %v141
  %v179 = vunpack.c.l.b16 %v142
  %v180 = vunpack.c.l.b16 %v143
  %v181 = vunpack.c.l.b16 %v144
  %v182 = vunpack.c.l.b16 %v145
  %v183 = vunpack.c.l.b16 %v146
  %v184 = vunpack.c.l.b16 %v147
  %v185 = vunpack.c.l.b16 %v148
  %v186 = vunpack.c.l.b16 %v149
  %v187 = vunpack.c.l.b16 %v150
  %v188 = vunpack.c.l.b16 %v151
  %v189 = vunpack.c.l.b16 %v152
  %v190 = vunpack.c.l.b16 %v153
  %v191 = vpack.c.b16 %v176, %v175
  %v192 = vpack.c.b16 %v178, %v177
  %v193 = vpack.c.b16 %v180, %v179
  %v194 = vpack.c.b16 %v182, %v181
  %v195 = vpack.c.b16 %v184, %v183
  %v196 = vpack.c.b16 %v186, %v185
  %v197 = vpack.c.b16 %v188, %v187
  %v198 = vpack.c.b16 %v190, %v189
  %207 = vmatpush.bf16.msra.mxu0 %v198
  %208 = vmatpush.bf16.msra.mxu0 %v197
  %209 = vmatpush.bf16.msra.mxu0 %v196
  %210 = vmatpush.bf16.msra.mxu0 %v195
  %211 = vmatpush.bf16.msra.mxu0 %v194
  %212 = vmatpush.bf16.msra.mxu0 %v193
  %213 = vmatpush.bf16.msra.mxu0 %v192
  %214 = vmatpush.bf16.msra.mxu0 %v191
  %215 = vmatmul.bf16.gmra.mxu0 %v154
  %v216 = vpop.f32.mrf.mxu0
  %v217 = vadd.f32 %v157, %v216
  %v218 = vpop.f32.mrf.mxu0
  %219 = vdwg.mxu0
  %v220 = vmax.f32 %v217, 0.0
  %v221 = vld [vmem:[%s5] sm:$0xf]
  %v222 = vld [vmem:[%s6] sm:$0xf]
  %v223 = vld [vmem:[%s6 + $0x4] sm:$0xf]
  %v224 = vld [vmem:[%s6 + $0x8] sm:$0xf]
  %v225 = vld [vmem:[%s6 + $0xc] sm:$0xf]
  %v226 = vld [vmem:[%s6 + $0x10] sm:$0xf]
  %v227 = vld [vmem:[%s6 + $0x14] sm:$0xf]
  %v228 = vld [vmem:[%s6 + $0x18] sm:$0xf]
  %v229 = vld [vmem:[%s6 + $0x1c] sm:$0xf]
  %v230 = vld [vmem:[%s6 + $0x20] sm:$0xf]
  %v231 = vld [vmem:[%s6 + $0x24] sm:$0xf]
  %v232 = vld [vmem:[%s6 + $0x28] sm:$0xf]
  %v233 = vld [vmem:[%s6 + $0x2c] sm:$0xf]
  %v234 = vld [vmem:[%s6 + $0x30] sm:$0xf]
  %v235 = vld [vmem:[%s6 + $0x34] sm:$0xf]
  %v236 = vld [vmem:[%s6 + $0x38] sm:$0xf]
  %v237 = vld [vmem:[%s6 + $0x3c] sm:$0xf]
  %v254 = vunpack.c.l.b16 %v222
  %v255 = vunpack.c.l.b16 %v223
  %v256 = vunpack.c.l.b16 %v224
  %v257 = vunpack.c.l.b16 %v225
  %v258 = vunpack.c.l.b16 %v226
  %v259 = vunpack.c.l.b16 %v227
  %v260 = vunpack.c.l.b16 %v228
  %v261 = vunpack.c.l.b16 %v229
  %v262 = vunpack.c.l.b16 %v230
  %v263 = vunpack.c.l.b16 %v231
  %v264 = vunpack.c.l.b16 %v232
  %v265 = vunpack.c.l.b16 %v233
  %v266 = vunpack.c.l.b16 %v234
  %v267 = vunpack.c.l.b16 %v235
  %v268 = vunpack.c.l.b16 %v236
  %v269 = vunpack.c.l.b16 %v237
  %v270 = vpack.c.b16 %v255, %v254
  %v271 = vpack.c.b16 %v257, %v256
  %v272 = vpack.c.b16 %v259, %v258
  %v273 = vpack.c.b16 %v261, %v260
  %v274 = vpack.c.b16 %v263, %v262
  %v275 = vpack.c.b16 %v265, %v264
  %v276 = vpack.c.b16 %v267, %v266
  %v277 = vpack.c.b16 %v269, %v268
  %286 = vmatpush.bf16.msra.mxu0 %v277
  %287 = vmatpush.bf16.msra.mxu0 %v276
  %288 = vmatpush.bf16.msra.mxu0 %v275
  %289 = vmatpush.bf16.msra.mxu0 %v274
  %290 = vmatpush.bf16.msra.mxu0 %v273
  %291 = vmatpush.bf16.msra.mxu0 %v272
  %292 = vmatpush.bf16.msra.mxu0 %v271
  %293 = vmatpush.bf16.msra.mxu0 %v270
  %294 = vmatmul.bf16.gmra.mxu0 %v221
  %v295 = vpop.f32.mrf.mxu0
  %v296 = vadd.f32 0.0, %v295
  %v297 = vpop.f32.mrf.mxu0
  %298 = vdwg.mxu0
  %v299 = vld [vmem:[%s7] sm:$0xf]
  %v300 = vld [vmem:[%s8] sm:$0xf]
  %v301 = vld [vmem:[%s8 + $0x4] sm:$0xf]
  %v302 = vld [vmem:[%s8 + $0x8] sm:$0xf]
  %v303 = vld [vmem:[%s8 + $0xc] sm:$0xf]
  %v304 = vld [vmem:[%s8 + $0x10] sm:$0xf]
  %v305 = vld [vmem:[%s8 + $0x14] sm:$0xf]
  %v306 = vld [vmem:[%s8 + $0x18] sm:$0xf]
  %v307 = vld [vmem:[%s8 + $0x1c] sm:$0xf]
  %v308 = vld [vmem:[%s8 + $0x20] sm:$0xf]
  %v309 = vld [vmem:[%s8 + $0x24] sm:$0xf]
  %v310 = vld [vmem:[%s8 + $0x28] sm:$0xf]
  %v311 = vld [vmem:[%s8 + $0x2c] sm:$0xf]
  %v312 = vld [vmem:[%s8 + $0x30] sm:$0xf]
  %v313 = vld [vmem:[%s8 + $0x34] sm:$0xf]
  %v314 = vld [vmem:[%s8 + $0x38] sm:$0xf]
  %v315 = vld [vmem:[%s8 + $0x3c] sm:$0xf]
  %v332 = vunpack.c.l.b16 %v300
  %v333 = vunpack.c.l.b16 %v301
  %v334 = vunpack.c.l.b16 %v302
  %v335 = vunpack.c.l.b16 %v303
  %v336 = vunpack.c.l.b16 %v304
  %v337 = vunpack.c.l.b16 %v305
  %v338 = vunpack.c.l.b16 %v306
  %v339 = vunpack.c.l.b16 %v307
  %v340 = vunpack.c.l.b16 %v308
  %v341 = vunpack.c.l.b16 %v309
  %v342 = vunpack.c.l.b16 %v310
  %v343 = vunpack.c.l.b16 %v311
  %v344 = vunpack.c.l.b16 %v312
  %v345 = vunpack.c.l.b16 %v313
  %v346 = vunpack.c.l.b16 %v314
  %v347 = vunpack.c.l.b16 %v315
  %v348 = vpack.c.b16 %v333, %v332
  %v349 = vpack.c.b16 %v335, %v334
  %v350 = vpack.c.b16 %v337, %v336
  %v351 = vpack.c.b16 %v339, %v338
  %v352 = vpack.c.b16 %v341, %v340
  %v353 = vpack.c.b16 %v343, %v342
  %v354 = vpack.c.b16 %v345, %v344
  %v355 = vpack.c.b16 %v347, %v346
  %364 = vmatpush.bf16.msra.mxu0 %v355
  %365 = vmatpush.bf16.msra.mxu0 %v354
  %366 = vmatpush.bf16.msra.mxu0 %v353
  %367 = vmatpush.bf16.msra.mxu0 %v352
  %368 = vmatpush.bf16.msra.mxu0 %v351
  %369 = vmatpush.bf16.msra.mxu0 %v350
  %370 = vmatpush.bf16.msra.mxu0 %v349
  %371 = vmatpush.bf16.msra.mxu0 %v348
  %372 = vmatmul.bf16.gmra.mxu0 %v299
  %v373 = vpop.f32.mrf.mxu0
  %v374 = vadd.f32 0.0, %v373
  %v375 = vpop.f32.mrf.mxu0
  %376 = vdwg.mxu0
  %v377 = vld [vmem:[%s9] sm:$0xf]
  %v378 = vld [vmem:[%s10] sm:$0xf]
  %v379 = vld [vmem:[%s10 + $0x4] sm:$0xf]
  %v380 = vld [vmem:[%s10 + $0x8] sm:$0xf]
  %v381 = vld [vmem:[%s10 + $0xc] sm:$0xf]
  %v382 = vld [vmem:[%s10 + $0x10] sm:$0xf]
  %v383 = vld [vmem:[%s10 + $0x14] sm:$0xf]
  %v384 = vld [vmem:[%s10 + $0x18] sm:$0xf]
  %v385 = vld [vmem:[%s10 + $0x1c] sm:$0xf]
  %v386 = vld [vmem:[%s10 + $0x20] sm:$0xf]
  %v387 = vld [vmem:[%s10 + $0x24] sm:$0xf]
  %v388 = vld [vmem:[%s10 + $0x28] sm:$0xf]
  %v389 = vld [vmem:[%s10 + $0x2c] sm:$0xf]
  %v390 = vld [vmem:[%s10 + $0x30] sm:$0xf]
  %v391 = vld [vmem:[%s10 + $0x34] sm:$0xf]
  %v392 = vld [vmem:[%s10 + $0x38] sm:$0xf]
  %v393 = vld [vmem:[%s10 + $0x3c] sm:$0xf]
  %v410 = vunpack.c.l.b16 %v378
  %v411 = vunpack.c.l.b16 %v379
  %v412 = vunpack.c.l.b16 %v380
  %v413 = vunpack.c.l.b16 %v381
  %v414 = vunpack.c.l.b16 %v382
  %v415 = vunpack.c.l.b16 %v383
  %v416 = vunpack.c.l.b16 %v384
  %v417 = vunpack.c.l.b16 %v385
  %v418 = vunpack.c.l.b16 %v386
  %v419 = vunpack.c.l.b16 %v387
  %v420 = vunpack.c.l.b16 %v388
  %v421 = vunpack.c.l.b16 %v389
  %v422 = vunpack.c.l.b16 %v390
  %v423 = vunpack.c.l.b16 %v391
  %v424 = vunpack.c.l.b16 %v392
  %v425 = vunpack.c.l.b16 %v393
  %v426 = vpack.c.b16 %v411, %v410
  %v427 = vpack.c.b16 %v413, %v412
  %v428 = vpack.c.b16 %v415, %v414
  %v429 = vpack.c.b16 %v417, %v416
  %v430 = vpack.c.b16 %v419, %v418
  %v431 = vpack.c.b16 %v421, %v420
  %v432 = vpack.c.b16 %v423, %v422
  %v433 = vpack.c.b16 %v425, %v424
  %442 = vmatpush.bf16.msra.mxu0 %v433
  %443 = vmatpush.bf16.msra.mxu0 %v432
  %444 = vmatpush.bf16.msra.mxu0 %v431
  %445 = vmatpush.bf16.msra.mxu0 %v430
  %446 = vmatpush.bf16.msra.mxu0 %v429
  %447 = vmatpush.bf16.msra.mxu0 %v428
  %448 = vmatpush.bf16.msra.mxu0 %v427
  %449 = vmatpush.bf16.msra.mxu0 %v426
  %450 = vmatmul.bf16.gmra.mxu0 %v377
  %v451 = vpop.f32.mrf.mxu0
  %v452 = vadd.f32 0.0, %v451
  %v453 = vpop.f32.mrf.mxu0
  %454 = vdwg.mxu0
  %v456 = vrot.slane %v220, 1
  %v457 = vrot.slane %v220, 2
  %v458 = vrot.slane %v220, 3
  %v459 = vrot.slane %v220, 4
  %v460 = vrot.slane %v220, 5
  %v461 = vrot.slane %v220, 6
  %v462 = vrot.slane %v220, 7
  %v471 = vrot.slane %v296, 1
  %v472 = vrot.slane %v296, 2
  %v473 = vrot.slane %v296, 3
  %v474 = vrot.slane %v296, 4
  %v475 = vrot.slane %v296, 5
  %v476 = vrot.slane %v296, 6
  %v477 = vrot.slane %v296, 7
  %v479 = vrot.slane %v374, 1
  %v480 = vrot.slane %v374, 2
  %v481 = vrot.slane %v374, 3
  %v482 = vrot.slane %v374, 4
  %v483 = vrot.slane %v374, 5
  %v484 = vrot.slane %v374, 6
  %v485 = vrot.slane %v374, 7
  %v487 = vrot.slane %v452, 1
  %v488 = vrot.slane %v452, 2
  %v489 = vrot.slane %v452, 3
  %v490 = vrot.slane %v452, 4
  %v491 = vrot.slane %v452, 5
  %v492 = vrot.slane %v452, 6
  %v493 = vrot.slane %v452, 7
  %v494 = vperm.slane %v296, 0
  %v495 = vperm.slane %v471, 0
  %v496 = vperm.slane %v472, 0
  %v497 = vperm.slane %v473, 0
  %v498 = vperm.slane %v474, 0
  %v499 = vperm.slane %v475, 0
  %v500 = vperm.slane %v476, 0
  %v501 = vperm.slane %v477, 0
  %v510 = vperm.slane %v374, 0
  %v511 = vperm.slane %v479, 0
  %v512 = vperm.slane %v480, 0
  %v513 = vperm.slane %v481, 0
  %v514 = vperm.slane %v482, 0
  %v515 = vperm.slane %v483, 0
  %v516 = vperm.slane %v484, 0
  %v517 = vperm.slane %v485, 0
  %v526 = vperm.slane %v452, 0
  %v527 = vperm.slane %v487, 0
  %v528 = vperm.slane %v488, 0
  %v529 = vperm.slane %v489, 0
  %v530 = vperm.slane %v490, 0
  %v531 = vperm.slane %v491, 0
  %v532 = vperm.slane %v492, 0
  %v533 = vperm.slane %v493, 0
  %vm542 = vcmask 1040384
  %v543 = vsel %vm542, %v220, %v494
  %v544 = vsel %vm542, %v456, %v495
  %v545 = vsel %vm542, %v457, %v496
  %v546 = vsel %vm542, %v458, %v497
  %v547 = vsel %vm542, %v459, %v498
  %v548 = vsel %vm542, %v460, %v499
  %v549 = vsel %vm542, %v461, %v500
  %v550 = vsel %vm542, %v462, %v501
  %vm551 = vcmask 1041408
  %v552 = vsel %vm551, %v543, %v510
  %v553 = vsel %vm551, %v544, %v511
  %v554 = vsel %vm551, %v545, %v512
  %v555 = vsel %vm551, %v546, %v513
  %v556 = vsel %vm551, %v547, %v514
  %v557 = vsel %vm551, %v548, %v515
  %v558 = vsel %vm551, %v549, %v516
  %v559 = vsel %vm551, %v550, %v517
  %vm560 = vcmask 1042432
  %v561 = vsel %vm560, %v552, %v526
  %v562 = vsel %vm560, %v553, %v527
  %v563 = vsel %vm560, %v554, %v528
  %v564 = vsel %vm560, %v555, %v529
  %v565 = vsel %vm560, %v556, %v530
  %v566 = vsel %vm560, %v557, %v531
  %v567 = vsel %vm560, %v558, %v532
  %v568 = vsel %vm560, %v559, %v533
  %v569 = vpack.c.bf16 %v561, %v561
  %v570 = vpack.c.bf16 %v562, %v562
  %v571 = vpack.c.bf16 %v563, %v563
  %v572 = vpack.c.bf16 %v564, %v564
  %v573 = vpack.c.bf16 %v565, %v565
  %v574 = vpack.c.bf16 %v566, %v566
  %v575 = vpack.c.bf16 %v567, %v567
  %v576 = vpack.c.bf16 %v568, %v568
  %577 = vmatpush.bf16.xpose.msra.mxu0 0
  %578 = vmatpush.bf16.xpose.msra.mxu0 0
  %579 = vmatpush.bf16.xpose.msra.mxu0 0
  %580 = vmatpush.bf16.xpose.msra.mxu0 0
  %581 = vmatpush.bf16.xpose.msra.mxu0 0
  %582 = vmatpush.bf16.xpose.msra.mxu0 0
  %583 = vmatpush.bf16.xpose.msra.mxu0 0
  %584 = vmatpush.bf16.xpose.msra.mxu0 %v569
  %585 = vmatmul.bf16.gmra.mxu0 %v569
  %v586 = vpop.f32.mrf.mxu0
  %v587 = vadd.f32 0.0, %v586
  %v588 = vpop.f32.mrf.mxu0
  %589 = vdwg.mxu0
  %590 = vmatpush.bf16.xpose.msra.mxu0 0
  %591 = vmatpush.bf16.xpose.msra.mxu0 0
  %592 = vmatpush.bf16.xpose.msra.mxu0 0
  %593 = vmatpush.bf16.xpose.msra.mxu0 0
  %594 = vmatpush.bf16.xpose.msra.mxu0 0
  %595 = vmatpush.bf16.xpose.msra.mxu0 0
  %596 = vmatpush.bf16.xpose.msra.mxu0 0
  %597 = vmatpush.bf16.xpose.msra.mxu0 %v570
  %598 = vmatmul.bf16.gmra.mxu0 %v570
  %v599 = vpop.f32.mrf.mxu0
  %v600 = vadd.f32 0.0, %v599
  %v601 = vpop.f32.mrf.mxu0
  %602 = vdwg.mxu0
  %603 = vmatpush.bf16.xpose.msra.mxu0 0
  %604 = vmatpush.bf16.xpose.msra.mxu0 0
  %605 = vmatpush.bf16.xpose.msra.mxu0 0
  %606 = vmatpush.bf16.xpose.msra.mxu0 0
  %607 = vmatpush.bf16.xpose.msra.mxu0 0
  %608 = vmatpush.bf16.xpose.msra.mxu0 0
  %609 = vmatpush.bf16.xpose.msra.mxu0 0
  %610 = vmatpush.bf16.xpose.msra.mxu0 %v571
  %611 = vmatmul.bf16.gmra.mxu0 %v571
  %v612 = vpop.f32.mrf.mxu0
  %v613 = vadd.f32 0.0, %v612
  %v614 = vpop.f32.mrf.mxu0
  %615 = vdwg.mxu0
  %616 = vmatpush.bf16.xpose.msra.mxu0 0
  %617 = vmatpush.bf16.xpose.msra.mxu0 0
  %618 = vmatpush.bf16.xpose.msra.mxu0 0
  %619 = vmatpush.bf16.xpose.msra.mxu0 0
  %620 = vmatpush.bf16.xpose.msra.mxu0 0
  %621 = vmatpush.bf16.xpose.msra.mxu0 0
  %622 = vmatpush.bf16.xpose.msra.mxu0 0
  %623 = vmatpush.bf16.xpose.msra.mxu0 %v572
  %624 = vmatmul.bf16.gmra.mxu0 %v572
  %v625 = vpop.f32.mrf.mxu0
  %v626 = vadd.f32 0.0, %v625
  %v627 = vpop.f32.mrf.mxu0
  %628 = vdwg.mxu0
  %629 = vmatpush.bf16.xpose.msra.mxu0 0
  %630 = vmatpush.bf16.xpose.msra.mxu0 0
  %631 = vmatpush.bf16.xpose.msra.mxu0 0
  %632 = vmatpush.bf16.xpose.msra.mxu0 0
  %633 = vmatpush.bf16.xpose.msra.mxu0 0
  %634 = vmatpush.bf16.xpose.msra.mxu0 0
  %635 = vmatpush.bf16.xpose.msra.mxu0 0
  %636 = vmatpush.bf16.xpose.msra.mxu0 %v573
  %637 = vmatmul.bf16.gmra.mxu0 %v573
  %v638 = vpop.f32.mrf.mxu0
  %v639 = vadd.f32 0.0, %v638
  %v640 = vpop.f32.mrf.mxu0
  %641 = vdwg.mxu0
  %642 = vmatpush.bf16.xpose.msra.mxu0 0
  %643 = vmatpush.bf16.xpose.msra.mxu0 0
  %644 = vmatpush.bf16.xpose.msra.mxu0 0
  %645 = vmatpush.bf16.xpose.msra.mxu0 0
  %646 = vmatpush.bf16.xpose.msra.mxu0 0
  %647 = vmatpush.bf16.xpose.msra.mxu0 0
  %648 = vmatpush.bf16.xpose.msra.mxu0 0
  %649 = vmatpush.bf16.xpose.msra.mxu0 %v574
  %650 = vmatmul.bf16.gmra.mxu0 %v574
  %v651 = vpop.f32.mrf.mxu0
  %v652 = vadd.f32 0.0, %v651
  %v653 = vpop.f32.mrf.mxu0
  %654 = vdwg.mxu0
  %655 = vmatpush.bf16.xpose.msra.mxu0 0
  %656 = vmatpush.bf16.xpose.msra.mxu0 0
  %657 = vmatpush.bf16.xpose.msra.mxu0 0
  %658 = vmatpush.bf16.xpose.msra.mxu0 0
  %659 = vmatpush.bf16.xpose.msra.mxu0 0
  %660 = vmatpush.bf16.xpose.msra.mxu0 0
  %661 = vmatpush.bf16.xpose.msra.mxu0 0
  %662 = vmatpush.bf16.xpose.msra.mxu0 %v575
  %663 = vmatmul.bf16.gmra.mxu0 %v575
  %v664 = vpop.f32.mrf.mxu0
  %v665 = vadd.f32 0.0, %v664
  %v666 = vpop.f32.mrf.mxu0
  %667 = vdwg.mxu0
  %668 = vmatpush.bf16.xpose.msra.mxu0 0
  %669 = vmatpush.bf16.xpose.msra.mxu0 0
  %670 = vmatpush.bf16.xpose.msra.mxu0 0
  %671 = vmatpush.bf16.xpose.msra.mxu0 0
  %672 = vmatpush.bf16.xpose.msra.mxu0 0
  %673 = vmatpush.bf16.xpose.msra.mxu0 0
  %674 = vmatpush.bf16.xpose.msra.mxu0 0
  %675 = vmatpush.bf16.xpose.msra.mxu0 %v576
  %676 = vmatmul.bf16.gmra.mxu0 %v576
  %v677 = vpop.f32.mrf.mxu0
  %v678 = vadd.f32 0.0, %v677
  %v679 = vpop.f32.mrf.mxu0
  %680 = vdwg.mxu0
  %v681 = vrot.slane %v613, 4
  %vm682 = vcmask 1047556
  %v683 = vsel %vm682, %v681, %v587
  %v685 = vunpack.c.l.s4 1983009808
  %v686 = vunpack.c.0.s8 %v685
  %v687 = vperm.slane %v683, %v686
  %v688 = vrot.slane %v626, 4
  %v689 = vsel %vm682, %v688, %v600
  %v691 = vunpack.c.l.s4 1983009808
  %v692 = vunpack.c.0.s8 %v691
  %v693 = vperm.slane %v689, %v692
  %v694 = vrot.slane %v665, 4
  %v695 = vsel %vm682, %v694, %v639
  %v697 = vunpack.c.l.s4 1983009808
  %v698 = vunpack.c.0.s8 %v697
  %v699 = vperm.slane %v695, %v698
  %v700 = vrot.slane %v678, 4
  %v701 = vsel %vm682, %v700, %v652
  %v703 = vunpack.c.l.s4 1983009808
  %v704 = vunpack.c.0.s8 %v703
  %v705 = vperm.slane %v701, %v704
  %v706 = vrot.slane %v693, 4
  %v707 = vsel %vm682, %v706, %v687
  %v708 = vrot.slane %v687, 4
  %v709 = vsel %vm682, %v693, %v708
  %v711 = vunpack.c.l.s4 1934713408
  %v712 = vunpack.c.0.s8 %v711
  %v713 = vperm.slane %v707, %v712
  %v715 = vunpack.c.l.s4 1934713408
  %v716 = vunpack.c.0.s8 %v715
  %v717 = vperm.slane %v709, %v716
  %v718 = vrot.slane %v705, 4
  %v719 = vsel %vm682, %v718, %v699
  %v720 = vrot.slane %v699, 4
  %v721 = vsel %vm682, %v705, %v720
  %v723 = vunpack.c.l.s4 1934713408
  %v724 = vunpack.c.0.s8 %v723
  %v725 = vperm.slane %v719, %v724
  %v727 = vunpack.c.l.s4 1934713408
  %v728 = vunpack.c.0.s8 %v727
  %v729 = vperm.slane %v721, %v728
  %v730 = vrot.slane %v725, 4
  %v731 = vsel %vm682, %v730, %v713
  %v732 = vrot.slane %v713, 4
  %v733 = vsel %vm682, %v725, %v732
  %v734 = vrot.slane %v729, 4
  %v735 = vsel %vm682, %v734, %v717
  %v736 = vrot.slane %v717, 4
  %v737 = vsel %vm682, %v729, %v736
  %739 = vrot.lane.b32.xlu0 %v733, 4
  %v740 = vpop.permute.xlu0 %739
  %743 = vrot.lane.b32.xlu0 %v735, 8
  %v744 = vpop.permute.xlu0 %743
  %747 = vrot.lane.b32.xlu0 %v737, 12
  %v748 = vpop.permute.xlu0 %747
  %vm750 = vcmask 31744
  %v751 = vsel %vm750, %v731, %v740
  %vm752 = vcmask 64512
  %v753 = vsel %vm752, %v751, %v744
  %vm754 = vcmask 97280
  %v755 = vsel %vm754, %v753, %v748
  %v756 = vpack.c.bf16 %v755, %v755
  %v757 = vld [vmem:[%s11] sm:$0xf]
  %v758 = vld [vmem:[%s11 + $0x4] sm:$0xf]
  %v759 = vld [vmem:[%s11 + $0x8] sm:$0xf]
  %v760 = vld [vmem:[%s11 + $0xc] sm:$0xf]
  %v761 = vld [vmem:[%s11 + $0x10] sm:$0xf]
  %v762 = vld [vmem:[%s11 + $0x14] sm:$0xf]
  %v763 = vld [vmem:[%s11 + $0x18] sm:$0xf]
  %v764 = vld [vmem:[%s11 + $0x1c] sm:$0xf]
  %v765 = vld [vmem:[%s11 + $0x20] sm:$0xf]
  %v766 = vld [vmem:[%s11 + $0x24] sm:$0xf]
  %v767 = vld [vmem:[%s11 + $0x28] sm:$0xf]
  %v768 = vld [vmem:[%s11 + $0x2c] sm:$0xf]
  %v769 = vld [vmem:[%s11 + $0x30] sm:$0xf]
  %v770 = vld [vmem:[%s11 + $0x34] sm:$0xf]
  %v771 = vld [vmem:[%s11 + $0x38] sm:$0xf]
  %v772 = vld [vmem:[%s11 + $0x3c] sm:$0xf]
  %v773 = vpack.c.bf16 %v220, %v220
  %v774 = vld [vmem:[%s12] sm:$0xf]
  %v775 = vld [vmem:[%s12 + $0x4] sm:$0xf]
  %v778 = vunpack.c.l.b16 %v774
  %v779 = vunpack.c.l.b16 %v775
  %v780 = vpack.c.b16 %v779, %v778
  %vm782 = vcmask 130048
  %v784 = vsel %vm782, %v756, 0
  %786 = vmatpush.bf16.msra.mxu0 0
  %787 = vmatpush.bf16.msra.mxu0 0
  %788 = vmatpush.bf16.msra.mxu0 0
  %789 = vmatpush.bf16.msra.mxu0 0
  %790 = vmatpush.bf16.msra.mxu0 0
  %791 = vmatpush.bf16.msra.mxu0 0
  %792 = vmatpush.bf16.msra.mxu0 0
  %793 = vmatpush.bf16.msra.mxu0 %v780
  %794 = vmatmul.bf16.gmra.mxu0 %v784
  %v795 = vpop.f32.mrf.mxu0
  %v796 = vadd.f32 0.0, %v795
  %v797 = vpop.f32.mrf.mxu0
  %798 = vdwg.mxu0
  %v815 = vunpack.c.l.b16 %v757
  %v816 = vunpack.c.l.b16 %v758
  %v817 = vunpack.c.l.b16 %v759
  %v818 = vunpack.c.l.b16 %v760
  %v819 = vunpack.c.l.b16 %v761
  %v820 = vunpack.c.l.b16 %v762
  %v821 = vunpack.c.l.b16 %v763
  %v822 = vunpack.c.l.b16 %v764
  %v823 = vunpack.c.l.b16 %v765
  %v824 = vunpack.c.l.b16 %v766
  %v825 = vunpack.c.l.b16 %v767
  %v826 = vunpack.c.l.b16 %v768
  %v827 = vunpack.c.l.b16 %v769
  %v828 = vunpack.c.l.b16 %v770
  %v829 = vunpack.c.l.b16 %v771
  %v830 = vunpack.c.l.b16 %v772
  %v831 = vpack.c.b16 %v816, %v815
  %v832 = vpack.c.b16 %v818, %v817
  %v833 = vpack.c.b16 %v820, %v819
  %v834 = vpack.c.b16 %v822, %v821
  %v835 = vpack.c.b16 %v824, %v823
  %v836 = vpack.c.b16 %v826, %v825
  %v837 = vpack.c.b16 %v828, %v827
  %v838 = vpack.c.b16 %v830, %v829
  %847 = vmatpush.bf16.msra.mxu0 %v838
  %848 = vmatpush.bf16.msra.mxu0 %v837
  %849 = vmatpush.bf16.msra.mxu0 %v836
  %850 = vmatpush.bf16.msra.mxu0 %v835
  %851 = vmatpush.bf16.msra.mxu0 %v834
  %852 = vmatpush.bf16.msra.mxu0 %v833
  %853 = vmatpush.bf16.msra.mxu0 %v832
  %854 = vmatpush.bf16.msra.mxu0 %v831
  %855 = vmatmul.bf16.gmra.mxu0 %v773
  %v856 = vpop.f32.mrf.mxu0
  %v857 = vadd.f32 %v796, %v856
  %v858 = vpop.f32.mrf.mxu0
  %859 = vdwg.mxu0
  %v860 = vld [vmem:[%s13] sm:$0x1]
  %v862 = vperm.slane %v860, 0
  %v864 = vadd.f32 %v857, %v862
  %v865 = vmax.f32 %v864, 0.0
  %v866 = vld [vmem:[%s14] sm:$0xf]
  %v867 = vld [vmem:[%s14 + $0x4] sm:$0xf]
  %v868 = vld [vmem:[%s14 + $0x8] sm:$0xf]
  %v869 = vld [vmem:[%s14 + $0xc] sm:$0xf]
  %v870 = vld [vmem:[%s14 + $0x10] sm:$0xf]
  %v871 = vld [vmem:[%s14 + $0x14] sm:$0xf]
  %v872 = vld [vmem:[%s14 + $0x18] sm:$0xf]
  %v873 = vld [vmem:[%s14 + $0x1c] sm:$0xf]
  %v874 = vld [vmem:[%s14 + $0x20] sm:$0xf]
  %v875 = vld [vmem:[%s14 + $0x24] sm:$0xf]
  %v876 = vld [vmem:[%s14 + $0x28] sm:$0xf]
  %v877 = vld [vmem:[%s14 + $0x2c] sm:$0xf]
  %v878 = vld [vmem:[%s14 + $0x30] sm:$0xf]
  %v879 = vld [vmem:[%s14 + $0x34] sm:$0xf]
  %v880 = vld [vmem:[%s14 + $0x38] sm:$0xf]
  %v881 = vld [vmem:[%s14 + $0x3c] sm:$0xf]
  %v882 = vpack.c.bf16 %v865, %v865
  %v883 = vld [vmem:[%s15] sm:$0x1]
  %v885 = vperm.slane %v883, 0
  %v903 = vunpack.c.l.b16 %v866
  %v904 = vunpack.c.l.b16 %v867
  %v905 = vunpack.c.l.b16 %v868
  %v906 = vunpack.c.l.b16 %v869
  %v907 = vunpack.c.l.b16 %v870
  %v908 = vunpack.c.l.b16 %v871
  %v909 = vunpack.c.l.b16 %v872
  %v910 = vunpack.c.l.b16 %v873
  %v911 = vunpack.c.l.b16 %v874
  %v912 = vunpack.c.l.b16 %v875
  %v913 = vunpack.c.l.b16 %v876
  %v914 = vunpack.c.l.b16 %v877
  %v915 = vunpack.c.l.b16 %v878
  %v916 = vunpack.c.l.b16 %v879
  %v917 = vunpack.c.l.b16 %v880
  %v918 = vunpack.c.l.b16 %v881
  %v919 = vpack.c.b16 %v904, %v903
  %v920 = vpack.c.b16 %v906, %v905
  %v921 = vpack.c.b16 %v908, %v907
  %v922 = vpack.c.b16 %v910, %v909
  %v923 = vpack.c.b16 %v912, %v911
  %v924 = vpack.c.b16 %v914, %v913
  %v925 = vpack.c.b16 %v916, %v915
  %v926 = vpack.c.b16 %v918, %v917
  %935 = vmatpush.bf16.msra.mxu0 %v926
  %936 = vmatpush.bf16.msra.mxu0 %v925
  %937 = vmatpush.bf16.msra.mxu0 %v924
  %938 = vmatpush.bf16.msra.mxu0 %v923
  %939 = vmatpush.bf16.msra.mxu0 %v922
  %940 = vmatpush.bf16.msra.mxu0 %v921
  %941 = vmatpush.bf16.msra.mxu0 %v920
  %942 = vmatpush.bf16.msra.mxu0 %v919
  %943 = vmatmul.bf16.gmra.mxu0 %v882
  %v944 = vpop.f32.mrf.mxu0
  %v945 = vadd.f32 %v885, %v944
  %v946 = vpop.f32.mrf.mxu0
  %947 = vdwg.mxu0
  %v948 = vxor.u32 %v945, 2147483648
  %v949 = vmul.f32 %v948, 1.442695
  %v950 = vpow.pop %v949
  %v951 = vadd.f32 %v950, 1.0
  %v952 = vrcp.pop %v951
  %v953 = vmul.f32 %v951, %v952
  %v954 = vsub.f32 1.0, %v953
  %v955 = vmul.f32 %v952, %v954
  %v956 = vadd.f32 %v952, %v955
  %vm957 = vweird.f32 %v951
  %vm958 = vweird.f32 %v952
  %vm959 = vmor %vm957, %vm958
  %v960 = vsel %vm959, %v952, %v956
  %v961 = vand.u32 2147483647, %v951
  %vm962 = vcmp.eq.f32.partialorder %v961, 8.507059e+37
  %v963 = vand.u32 %v951, 2147483648
  %v964 = vor.u32 1.1754944e-38, %v963
  %v965 = vsel %vm962, %v964, %v960
  %v966 = vmul.f32 1.0, %v965
  %967 = vst [vmem:[%s16] sm:$0xff] %v966
  // Predicated region
  $region66: #{_dlrm_forward.1} parent=0 // pred_check
    _
  $region67: #{_dlrm_forward.1} parent=0 // pred_check_branch
    %969 = sbr.rel (0) target = $region69
  $region68: #{_dlrm_forward.1} parent=0 // pred_region
    _
  $region69: #{_dlrm_forward.1} parent=0 // pred_fallthru
    _
  // Predicated region
  $region70: #{_dlrm_forward.1} parent=0 // pred_check
    _
  $region71: #{_dlrm_forward.1} parent=0 // pred_check_branch
    %971 = sbr.rel (0) target = $region73
  $region72: #{_dlrm_forward.1} parent=0 // pred_region
    _
  $region73: #{_dlrm_forward.1} parent=0 // pred_fallthru
    _

</llo_original>
